<compile_context>
chip_gen: v6e
topology: v6e:2x2x1
jax: 0.10.0
libtpu: 0.0.40
codegen_flags: <defaults>
</compile_context>

<pallas_src>
import jax
import jax.numpy as jnp
from jax import lax
from jax.experimental import pallas as pl
from jax.experimental.pallas import tpu as pltpu


_ACTIVATIONS = ('identity', 'relu', 'leaky_relu', 'elu')

_PASS1_BLOCK_ELEMS = 1 << 20      # ~4 MiB f32-equivalent per x block
_PASS2_BLOCK_ELEMS = 1 << 20      # ~4 MiB f32-equivalent per direction per block
_PASS1_INPUT_BUFFERS = 3          # requested pipeline depth on the streaming x input
_PASS1_MAX_LANES = 4096           # caps the unrolled lane-partial accumulate at 32 slices
_VMEM_LIMIT_MIN = 16 << 20
_VMEM_LIMIT_MAX = 48 << 20        # safe on v7x (64 MiB physical per TensorCore)


# --------------------------------------------------------------------------------------
# Tiling helpers
# --------------------------------------------------------------------------------------
def _largest_divisor_leq(n, cap):
    cap = max(1, min(n, cap))
    for d in range(cap, 0, -1):
        if n % d == 0:
            return d
    return 1


def _pick_c_tile(c):
    """Channel tile: a multiple of 8 (sublane rule) dividing C, capped at min(C//2, 256) so
    the pass-1 C axis has >= 2 'parallel' steps (v7x megacore). Small / odd C keeps the full
    channel axis (block dim == full dim is always legal)."""
    if c < 16 or c % 8 != 0:
        return c
    cap = min(c // 2, 256)
    best = 8
    for d in range(8, cap + 1, 8):
        if c % d == 0:
            best = d
    return best


def _pick_hw_tile(hw, row_elems, budget_elems, max_lanes=None):
    """Lane tile: a multiple of 128 (lane rule) chosen from the element budget; HW < 128 uses
    the full (legal) dimension. Tiles need not divide HW (tails handled by callers)."""
    if hw < 128:
        return hw
    cap = max(128, (budget_elems // max(row_elems, 1)) // 128 * 128)
    if max_lanes is not None:
        cap = max(128, min(cap, max_lanes))
    return min(cap, (hw // 128) * 128)


def _vmem_limit(footprint_bytes):
    return int(min(max(footprint_bytes * 5 // 4 + (2 << 20), _VMEM_LIMIT_MIN),
                   _VMEM_LIMIT_MAX))


def _apply_activation(y, activation, activation_param):
    if activation == 'relu':
        return jnp.maximum(y, 0.0)
    if activation == 'leaky_relu':
        return jnp.where(y >= 0.0, y, y * activation_param)
    if activation == 'elu':
        return jnp.where(y >= 0.0, y, activation_param * (jnp.exp(y) - 1.0))
    return y  # identity


# --------------------------------------------------------------------------------------
# Pass 1: per-channel statistics -> packed (C, 4) = [scale, shift, new_rm, new_rv]
# --------------------------------------------------------------------------------------
def _make_stats_kernel(*, eps, count, momentum, hw, t, mask_tail, lane_partial):
    inv_count = 1.0 / count
    # NOTE: count == 1 maps unbiased var onto biased var instead of PyTorch's inf/NaN.
    bessel = count / max(count - 1.0, 1.0)

    def stats_kernel(params_ref, x_ref, stats_ref, sum_ref, sq_ref):
        n_i = pl.program_id(1)
        hw_i = pl.program_id(2)
        is_first = jnp.logical_and(n_i == 0, hw_i == 0)
        is_last = jnp.logical_and(n_i == pl.num_programs(1) - 1,
                                  hw_i == pl.num_programs(2) - 1)

        @pl.when(is_first)
        def _init():
            sum_ref[...] = jnp.zeros_like(sum_ref)
            sq_ref[...] = jnp.zeros_like(sq_ref)

        rm = params_ref[:, 2:3]                            # (CB, 1) running_mean (f32)
        x = x_ref[...].astype(jnp.float32)                 # (NB, CB, T)
        # Shifted sums: accumulate (x - running_mean) so the one-pass variance does not
        # suffer catastrophic cancellation when |mean| >> std at large counts.
        xc = x - rm[None]                                  # (NB, CB, T)
        if mask_tail:
            lane = lax.broadcasted_iota(jnp.int32, (1, 1, t), 2)
            xc = jnp.where(hw_i * t + lane < hw, xc, 0.0)

        s1 = jnp.sum(xc, axis=0)                           # (CB, T)  VPU vreg adds over NB
        s2 = jnp.sum(xc * xc, axis=0)                      # (CB, T)

        if lane_partial:
            # 128-lane partial accumulators: steady state stays on the VPU; the single
            # cross-lane (XLU) reduce is deferred to the finalize branch.
            for j in range(t // 128):
                sl = slice(j * 128, (j + 1) * 128)
                sum_ref[...] += s1[:, sl]
                sq_ref[...] += s2[:, sl]
        else:  # t == hw < 128: single tiny tile, reduce directly
            sum_ref[...] += jnp.sum(s1, axis=1, keepdims=True)
            sq_ref[...] += jnp.sum(s2, axis=1, keepdims=True)

        @pl.when(is_last)
        def _finalize():
            if lane_partial:
                tot1 = jnp.sum(sum_ref[...], axis=1, keepdims=True)   # (CB, 1)
                tot2 = jnp.sum(sq_ref[...], axis=1, keepdims=True)
            else:
                tot1 = sum_ref[...]
                tot2 = sq_ref[...]

            p = params_ref[...]                            # (CB, 4) f32
            w, b = p[:, 0:1], p[:, 1:2]
            rmu, rv = p[:, 2:3], p[:, 3:4]

            mean_c = tot1 * inv_count                      # E[x] - running_mean
            ex2_c = tot2 * inv_count                       # E[(x - running_mean)^2]
            var_b = jnp.maximum(ex2_c - mean_c * mean_c, 0.0)   # biased batch variance
            var_u = var_b * bessel                         # unbiased (torch .var / EMA)
            mean = mean_c + rmu                            # absolute batch mean

            inv_rstd = lax.rsqrt(rv + eps)                 # 1 / running_std (EUP)
            r = jnp.sqrt(var_u + eps) * inv_rstd
            d = mean_c * inv_rstd                          # (mean - running_mean)/running_std
            # NOTE: this ABR applies no r/d clamping (matches the PyTorch module).
            w_eff = w * r
            b_eff = b + w * d

            inv_std = lax.rsqrt(var_b + eps)
            scale = w_eff * inv_std
            shift = b_eff - mean * scale

            stats_ref[:, 0:1] = scale
            stats_ref[:, 1:2] = shift
            stats_ref[:, 2:3] = (1.0 - momentum) * rmu + momentum * mean
            stats_ref[:, 3:4] = (1.0 - momentum) * rv + momentum * var_u

    return stats_kernel


# --------------------------------------------------------------------------------------
# Pass 2: y = x * scale + shift (+ activation)
# --------------------------------------------------------------------------------------
def _make_apply_kernel(activation, activation_param):
    def apply_kernel(stats_ref, x_ref, o_ref):
        scale = stats_ref[:, 0:1][None]                    # (1, C, 1)
        shift = stats_ref[:, 1:2][None]
        x = x_ref[...].astype(jnp.float32)                 # (NB2, C, T2)
        y = x * scale + shift
        y = _apply_activation(y, activation, activation_param)
        o_ref[...] = y.astype(o_ref.dtype)
    return apply_kernel


# --------------------------------------------------------------------------------------
# Wrapper
# --------------------------------------------------------------------------------------
def abr_forward(x, weight, bias, running_mean, running_var, *,
                eps=1e-5, momentum=0.05, activation='identity', activation_param=0.01):
    """ABR forward (training, renorm=True) for NCHW input.

    Returns (y, new_running_mean, new_running_var)."""
    if activation not in _ACTIVATIONS:
        raise RuntimeError(f'Unknown activation function {activation}')

    N, C, H, W = x.shape
    HW = H * W
    count = float(N * HW)
    x_isz = jnp.dtype(x.dtype).itemsize

    # Zero-copy NCHW view (memory-bound op: avoid transposes / extra HBM traffic).
    x_view = x.reshape(N, C, HW)
    # Pack the four per-channel parameters into one (C, 4) array (single tiny DMA).
    params = jnp.stack([weight, bias, running_mean, running_var], axis=1).astype(jnp.float32)

    # ------------------------------ Pass 1: statistics ------------------------------
    CB = _pick_c_tile(C)
    T1 = _pick_hw_tile(HW, CB, _PASS1_BLOCK_ELEMS, max_lanes=_PASS1_MAX_LANES)
    NB1 = _largest_divisor_leq(N, max(1, _PASS1_BLOCK_ELEMS // (CB * T1)))
    GC, GN, GHW1 = C // CB, N // NB1, pl.cdiv(HW, T1)
    mask_tail = (HW % T1) != 0
    lane_partial = (T1 % 128) == 0
    lanes1 = 128 if lane_partial else 1

    stats_kernel_fn = _make_stats_kernel(eps=eps, count=count, momentum=momentum,
                                         hw=HW, t=T1, mask_tail=mask_tail,
                                         lane_partial=lane_partial)
    blk1 = NB1 * CB * T1

    def _stats_call(x_spec, buffers):
        fp1 = (buffers * blk1 * x_isz         # streaming x windows
               + 2 * blk1 * 4                 # f32 elementwise intermediates headroom
               + 2 * CB * lanes1 * 4          # sum / sumsq scratch
               + 4 * CB * 4 * 4)              # params + stats windows
        return pl.pallas_call(
            stats_kernel_fn,
            out_shape=jax.ShapeDtypeStruct((C, 4), jnp.float32),
            grid_spec=pltpu.PrefetchScalarGridSpec(
                num_scalar_prefetch=0,
                grid=(GC, GN, GHW1),          # C parallel (megacore); reductions innermost
                in_specs=[
                    pl.BlockSpec((CB, 4), lambda c, n, h: (c, 0)),
                    x_spec,
                ],
                out_specs=pl.BlockSpec((CB, 4), lambda c, n, h: (c, 0)),
                scratch_shapes=[pltpu.VMEM((CB, lanes1), jnp.float32),
                                pltpu.VMEM((CB, lanes1), jnp.float32)],
            ),
            compiler_params=pltpu.CompilerParams(
                dimension_semantics=("parallel", "arbitrary", "arbitrary"),
                vmem_limit_bytes=_vmem_limit(fp1)),
        )(params, x_view)

    x1_map = lambda c, n, h: (n, c, h)
    try:
        stats = _stats_call(
            pl.BlockSpec((NB1, CB, T1), x1_map,
                         pipeline_mode=pl.Buffered(_PASS1_INPUT_BUFFERS)),
            _PASS1_INPUT_BUFFERS)
    except Exception:
        # Pallas build without pipeline_mode / Buffered support: default double-buffering.
        stats = _stats_call(pl.BlockSpec((NB1, CB, T1), x1_map), 2)

    # ------------------------------ Pass 2: apply + activation ----------------------
    T2 = _pick_hw_tile(HW, C, _PASS2_BLOCK_ELEMS)
    NB2 = min(N, max(1, _PASS2_BLOCK_ELEMS // (C * T2)))   # block several N per step
    GN2, GHW2 = pl.cdiv(N, NB2), pl.cdiv(HW, T2)

    blk2 = NB2 * C * T2
    fp2 = (4 * blk2 * x_isz                   # in + out, double-buffered
           + 2 * blk2 * 4                     # f32 intermediates headroom
           + 2 * C * 4 * 4)                   # stats window
    y_flat = pl.pallas_call(
        _make_apply_kernel(activation, activation_param),
        out_shape=jax.ShapeDtypeStruct((N, C, HW), x.dtype),
        grid_spec=pltpu.PrefetchScalarGridSpec(
            num_scalar_prefetch=0,
            grid=(GN2, GHW2),
            in_specs=[
                pl.BlockSpec((C, 4), lambda n, h: (0, 0)),
                pl.BlockSpec((NB2, C, T2), lambda n, h: (n, 0, h)),
            ],
            out_specs=pl.BlockSpec((NB2, C, T2), lambda n, h: (n, 0, h)),
        ),
        compiler_params=pltpu.CompilerParams(
            dimension_semantics=("parallel", "parallel"),
            vmem_limit_bytes=_vmem_limit(fp2)),
    )(stats, x_view)

    y = y_flat.reshape(N, C, H, W)
    # TODO(synk): for C < 8 the (C, T) sublane occupancy is C/8; fixing it needs a layout
    # transpose that would re-introduce the extra HBM traffic removed here.
    return y, stats[:, 2], stats[:, 3]


# --------------------------------------------------------------------------------------
# Pure-JAX reference (mirrors the PyTorch forward, training + renorm=True)
# --------------------------------------------------------------------------------------
def abr_reference(x, weight, bias, running_mean, running_var, *,
                  eps=1e-5, momentum=0.05, activation='identity', activation_param=0.01):
    N, C, H, W = x.shape
    xt = jnp.transpose(x, (1, 0, 2, 3)).reshape(C, -1).astype(jnp.float32)
    mean = xt.mean(axis=1)
    var_u = jnp.var(xt, axis=1, ddof=1)
    var_b = jnp.var(xt, axis=1, ddof=0)
    running_std = jnp.sqrt(running_var + eps)
    r = jnp.sqrt(var_u + eps) / running_std
    d = (mean - running_mean) / running_std
    w_eff = weight * r
    b_eff = bias + weight * d
    bc = lambda v: v[None, :, None, None]
    y = (x.astype(jnp.float32) - bc(mean)) / bc(jnp.sqrt(var_b + eps)) * bc(w_eff) + bc(b_eff)
    y = _apply_activation(y, activation, activation_param)
    new_rm = (1.0 - momentum) * running_mean + momentum * mean
    new_rv = (1.0 - momentum) * running_var + momentum * var_u
    return y.astype(x.dtype), new_rm, new_rv


if __name__ == "__main__":
    key = jax.random.PRNGKey(0)

    configs = [
        # (shape, dtype, activation, activation_param, y_tol)
        ((2, 4, 16, 16), jnp.float32, 'identity', 0.01, 1e-4),
        ((2, 4, 16, 16), jnp.float32, 'leaky_relu', 0.01, 1e-4),
        ((2, 8, 10, 13), jnp.float32, 'elu', 1.0, 1e-4),       # non-128-multiple HW (tail mask)
        ((2, 4, 16, 16), jnp.bfloat16, 'relu', 0.01, 5e-2),    # low-precision input path
    ]

    for idx, (shape, dtype, act, act_p, tol) in enumerate(configs):
        key, sub = jax.random.split(key)
        n, c, h, w = shape
        x = (jax.random.normal(sub, shape, dtype=jnp.float32) * 2.0 + 0.5).astype(dtype)

        # Default init per ABR.reset_parameters(): weight=1, bias=0, rm=0, rv=1.
        weight = jnp.ones((c,), jnp.float32)
        bias = jnp.zeros((c,), jnp.float32)
        running_mean = jnp.zeros((c,), jnp.float32)
        running_var = jnp.ones((c,), jnp.float32)
        if idx == 2:  # exercise the full renorm path with non-trivial buffers/affine params
            running_mean = jnp.linspace(-0.5, 0.5, c, dtype=jnp.float32)
            running_var = jnp.linspace(0.5, 1.5, c, dtype=jnp.float32)
            weight = jnp.linspace(0.5, 1.5, c, dtype=jnp.float32)
            bias = jnp.linspace(-0.1, 0.1, c, dtype=jnp.float32)

        y, nrm, nrv = abr_forward(x, weight, bias, running_mean, running_var,
                                  eps=1e-5, momentum=0.05,
                                  activation=act, activation_param=act_p)
        y = jax.block_until_ready(y)

        y_ref, nrm_ref, nrv_ref = abr_reference(x, weight, bias, running_mean, running_var,
                                                eps=1e-5, momentum=0.05,
                                                activation=act, activation_param=act_p)
        assert y.shape == shape and y.dtype == x.dtype
        assert jnp.allclose(y.astype(jnp.float32), y_ref.astype(jnp.float32),
                            rtol=tol, atol=tol), f"output mismatch ({shape}, {act}, {dtype})"
        assert jnp.allclose(nrm, nrm_ref, rtol=1e-4, atol=1e-4), f"running_mean mismatch ({act})"
        assert jnp.allclose(nrv, nrv_ref, rtol=1e-4, atol=1e-4), f"running_var mismatch ({act})"

    print("KERNEL_OK")
</pallas_src>

<mosaic_0001>
module attributes {stable_mosaic.version = 11 : i64} {
  func.func @stats_kernel(%arg0: i32, %arg1: i32, %arg2: i32, %arg3: memref<4x4xf32, #tpu.memory_space<vmem>>, %arg4: memref<2x4x256xf32, #tpu.memory_space<vmem>>, %arg5: memref<4x4xf32, #tpu.memory_space<vmem>>, %arg6: memref<4x128xf32, #tpu.memory_space<vmem>>, %arg7: memref<4x128xf32, #tpu.memory_space<vmem>>) attributes {dimension_semantics = [#tpu.dimension_semantics<parallel>, #tpu.dimension_semantics<arbitrary>, #tpu.dimension_semantics<arbitrary>], iteration_bounds = array<i64: 1, 1, 1>, scalar_prefetch = 0 : i64, scratch_operands = 2 : i64, tpu.core_type = #tpu.core_type<tc>, window_params = [{transform_indices = @transform_0, window_bounds = array<i64: 4, 4>}, {transform_indices = @transform_1, window_bounds = array<i64: 2, 4, 256>}, {transform_indices = @transform_2, window_bounds = array<i64: 4, 4>}]} {
    %c0_i32 = arith.constant 0 : i32
    %0 = arith.cmpi eq, %arg1, %c0_i32 : i32
    %c0_i32_0 = arith.constant 0 : i32
    %1 = arith.cmpi eq, %arg2, %c0_i32_0 : i32
    %2 = arith.andi %0, %1 : i1
    %c0_i32_1 = arith.constant 0 : i32
    %3 = arith.cmpi eq, %arg1, %c0_i32_1 : i32
    %c0_i32_2 = arith.constant 0 : i32
    %4 = arith.cmpi eq, %arg2, %c0_i32_2 : i32
    %5 = arith.andi %3, %4 : i1
    %6 = arith.extui %2 : i1 to i32
    %c0_i32_3 = arith.constant 0 : i32
    %7 = arith.cmpi ne, %6, %c0_i32_3 : i32
    scf.if %7 {
      %cst_25 = arith.constant 0.000000e+00 : f32
      %34 = vector.broadcast %cst_25 : f32 to vector<4x128xf32>
      %c0_26 = arith.constant 0 : index
      %c0_27 = arith.constant 0 : index
      %35 = vector.load %arg6[%c0_26, %c0_27] : memref<4x128xf32, #tpu.memory_space<vmem>>, vector<4x128xf32>
      tpu.vector_store %arg6[%c0_26, %c0_27], %34 {strides = array<i32>} : memref<4x128xf32, #tpu.memory_space<vmem>>, vector<4x128xf32>,
      %cst_28 = arith.constant 0.000000e+00 : f32
      %36 = vector.broadcast %cst_28 : f32 to vector<4x128xf32>
      %c0_29 = arith.constant 0 : index
      %c0_30 = arith.constant 0 : index
      %37 = vector.load %arg7[%c0_29, %c0_30] : memref<4x128xf32, #tpu.memory_space<vmem>>, vector<4x128xf32>
      tpu.vector_store %arg7[%c0_29, %c0_30], %36 {strides = array<i32>} : memref<4x128xf32, #tpu.memory_space<vmem>>, vector<4x128xf32>,
    } else {
    }
    %c0 = arith.constant 0 : index
    %c2 = arith.constant 2 : index
    %8 = vector.load %arg3[%c0, %c2] : memref<4x4xf32, #tpu.memory_space<vmem>>, vector<4x1xf32>
    %c0_4 = arith.constant 0 : index
    %c0_5 = arith.constant 0 : index
    %c0_6 = arith.constant 0 : index
    %9 = vector.load %arg4[%c0_4, %c0_5, %c0_6] : memref<2x4x256xf32, #tpu.memory_space<vmem>>, vector<2x4x256xf32>
    %10 = vector.shape_cast %8 : vector<4x1xf32> to vector<1x4x1xf32>
    %11 = vector.broadcast %10 : vector<1x4x1xf32> to vector<2x4x256xf32>
    %12 = arith.subf %9, %11 : vector<2x4x256xf32>
    %cst = arith.constant dense<0.000000e+00> : vector<4x256xf32>
    %13 = vector.multi_reduction <add>, %12, %cst [0] : vector<2x4x256xf32> to vector<4x256xf32>
    %14 = arith.mulf %12, %12 : vector<2x4x256xf32>
    %cst_7 = arith.constant dense<0.000000e+00> : vector<4x256xf32>
    %15 = vector.multi_reduction <add>, %14, %cst_7 [0] : vector<2x4x256xf32> to vector<4x256xf32>
    %c0_8 = arith.constant 0 : index
    %c0_9 = arith.constant 0 : index
    %16 = vector.load %arg6[%c0_8, %c0_9] : memref<4x128xf32, #tpu.memory_space<vmem>>, vector<4x128xf32>
    %17 = vector.extract_strided_slice %13 {offsets = [0, 0], sizes = [4, 128], strides = [1, 1]} : vector<4x256xf32> to vector<4x128xf32>
    %18 = arith.addf %16, %17 : vector<4x128xf32>
    %c0_10 = arith.constant 0 : index
    %c0_11 = arith.constant 0 : index
    %19 = vector.load %arg6[%c0_10, %c0_11] : memref<4x128xf32, #tpu.memory_space<vmem>>, vector<4x128xf32>
    tpu.vector_store %arg6[%c0_10, %c0_11], %18 {strides = array<i32>} : memref<4x128xf32, #tpu.memory_space<vmem>>, vector<4x128xf32>,
    %c0_12 = arith.constant 0 : index
    %c0_13 = arith.constant 0 : index
    %20 = vector.load %arg7[%c0_12, %c0_13] : memref<4x128xf32, #tpu.memory_space<vmem>>, vector<4x128xf32>
    %21 = vector.extract_strided_slice %15 {offsets = [0, 0], sizes = [4, 128], strides = [1, 1]} : vector<4x256xf32> to vector<4x128xf32>
    %22 = arith.addf %20, %21 : vector<4x128xf32>
    %c0_14 = arith.constant 0 : index
    %c0_15 = arith.constant 0 : index
    %23 = vector.load %arg7[%c0_14, %c0_15] : memref<4x128xf32, #tpu.memory_space<vmem>>, vector<4x128xf32>
    tpu.vector_store %arg7[%c0_14, %c0_15], %22 {strides = array<i32>} : memref<4x128xf32, #tpu.memory_space<vmem>>, vector<4x128xf32>,
    %c0_16 = arith.constant 0 : index
    %c0_17 = arith.constant 0 : index
    %24 = vector.load %arg6[%c0_16, %c0_17] : memref<4x128xf32, #tpu.memory_space<vmem>>, vector<4x128xf32>
    %25 = vector.extract_strided_slice %13 {offsets = [0, 128], sizes = [4, 128], strides = [1, 1]} : vector<4x256xf32> to vector<4x128xf32>
    %26 = arith.addf %24, %25 : vector<4x128xf32>
    %c0_18 = arith.constant 0 : index
    %c0_19 = arith.constant 0 : index
    %27 = vector.load %arg6[%c0_18, %c0_19] : memref<4x128xf32, #tpu.memory_space<vmem>>, vector<4x128xf32>
    tpu.vector_store %arg6[%c0_18, %c0_19], %26 {strides = array<i32>} : memref<4x128xf32, #tpu.memory_space<vmem>>, vector<4x128xf32>,
    %c0_20 = arith.constant 0 : index
    %c0_21 = arith.constant 0 : index
    %28 = vector.load %arg7[%c0_20, %c0_21] : memref<4x128xf32, #tpu.memory_space<vmem>>, vector<4x128xf32>
    %29 = vector.extract_strided_slice %15 {offsets = [0, 128], sizes = [4, 128], strides = [1, 1]} : vector<4x256xf32> to vector<4x128xf32>
    %30 = arith.addf %28, %29 : vector<4x128xf32>
    %c0_22 = arith.constant 0 : index
    %c0_23 = arith.constant 0 : index
    %31 = vector.load %arg7[%c0_22, %c0_23] : memref<4x128xf32, #tpu.memory_space<vmem>>, vector<4x128xf32>
    tpu.vector_store %arg7[%c0_22, %c0_23], %30 {strides = array<i32>} : memref<4x128xf32, #tpu.memory_space<vmem>>, vector<4x128xf32>,
    %32 = arith.extui %5 : i1 to i32
    %c0_i32_24 = arith.constant 0 : i32
    %33 = arith.cmpi ne, %32, %c0_i32_24 : i32
    scf.if %33 {
      %c0_25 = arith.constant 0 : index
      %c0_26 = arith.constant 0 : index
      %34 = vector.load %arg6[%c0_25, %c0_26] : memref<4x128xf32, #tpu.memory_space<vmem>>, vector<4x128xf32>
      %cst_27 = arith.constant dense<0.000000e+00> : vector<4xf32>
      %35 = vector.multi_reduction <add>, %34, %cst_27 [1] : vector<4x128xf32> to vector<4xf32>
      %36 = vector.shape_cast %35 : vector<4xf32> to vector<4x1xf32>
      %c0_28 = arith.constant 0 : index
      %c0_29 = arith.constant 0 : index
      %37 = vector.load %arg7[%c0_28, %c0_29] : memref<4x128xf32, #tpu.memory_space<vmem>>, vector<4x128xf32>
      %cst_30 = arith.constant dense<0.000000e+00> : vector<4xf32>
      %38 = vector.multi_reduction <add>, %37, %cst_30 [1] : vector<4x128xf32> to vector<4xf32>
      %39 = vector.shape_cast %38 : vector<4xf32> to vector<4x1xf32>
      %c0_31 = arith.constant 0 : index
      %c0_32 = arith.constant 0 : index
      %40 = vector.load %arg3[%c0_31, %c0_32] : memref<4x4xf32, #tpu.memory_space<vmem>>, vector<4x4xf32>
      %41 = vector.extract_strided_slice %40 {offsets = [0, 0], sizes = [4, 1], strides = [1, 1]} : vector<4x4xf32> to vector<4x1xf32>
      %42 = vector.extract_strided_slice %40 {offsets = [0, 1], sizes = [4, 1], strides = [1, 1]} : vector<4x4xf32> to vector<4x1xf32>
      %43 = vector.extract_strided_slice %40 {offsets = [0, 2], sizes = [4, 1], strides = [1, 1]} : vector<4x4xf32> to vector<4x1xf32>
      %44 = vector.extract_strided_slice %40 {offsets = [0, 3], sizes = [4, 1], strides = [1, 1]} : vector<4x4xf32> to vector<4x1xf32>
      %cst_33 = arith.constant 0.001953125 : f32
      %45 = vector.broadcast %cst_33 : f32 to vector<4x1xf32>
      %46 = arith.mulf %36, %45 : vector<4x1xf32>
      %cst_34 = arith.constant 0.001953125 : f32
      %47 = vector.broadcast %cst_34 : f32 to vector<4x1xf32>
      %48 = arith.mulf %39, %47 : vector<4x1xf32>
      %49 = arith.mulf %46, %46 : vector<4x1xf32>
      %50 = arith.subf %48, %49 : vector<4x1xf32>
      %cst_35 = arith.constant 0.000000e+00 : f32
      %51 = vector.broadcast %cst_35 : f32 to vector<4x1xf32>
      %52 = arith.maximumf %50, %51 : vector<4x1xf32>
      %cst_36 = arith.constant 1.00195694 : f32
      %53 = vector.broadcast %cst_36 : f32 to vector<4x1xf32>
      %54 = arith.mulf %52, %53 : vector<4x1xf32>
      %55 = arith.addf %46, %43 : vector<4x1xf32>
      %cst_37 = arith.constant 9.99999974E-6 : f32
      %56 = vector.broadcast %cst_37 : f32 to vector<4x1xf32>
      %57 = arith.addf %44, %56 : vector<4x1xf32>
      %58 = math.rsqrt %57 : vector<4x1xf32>
      %cst_38 = arith.constant 9.99999974E-6 : f32
      %59 = vector.broadcast %cst_38 : f32 to vector<4x1xf32>
      %60 = arith.addf %54, %59 : vector<4x1xf32>
      %61 = math.sqrt %60 : vector<4x1xf32>
      %62 = arith.mulf %61, %58 : vector<4x1xf32>
      %63 = arith.mulf %46, %58 : vector<4x1xf32>
      %64 = arith.mulf %41, %62 : vector<4x1xf32>
      %65 = arith.mulf %41, %63 : vector<4x1xf32>
      %66 = arith.addf %42, %65 : vector<4x1xf32>
      %cst_39 = arith.constant 9.99999974E-6 : f32
      %67 = vector.broadcast %cst_39 : f32 to vector<4x1xf32>
      %68 = arith.addf %52, %67 : vector<4x1xf32>
      %69 = math.rsqrt %68 : vector<4x1xf32>
      %70 = arith.mulf %64, %69 : vector<4x1xf32>
      %71 = arith.mulf %55, %70 : vector<4x1xf32>
      %72 = arith.subf %66, %71 : vector<4x1xf32>
      %c0_40 = arith.constant 0 : index
      %c0_41 = arith.constant 0 : index
      %73 = vector.load %arg5[%c0_40, %c0_41] : memref<4x4xf32, #tpu.memory_space<vmem>>, vector<4x1xf32>
      tpu.vector_store %arg5[%c0_40, %c0_41], %70 {strides = array<i32>} : memref<4x4xf32, #tpu.memory_space<vmem>>, vector<4x1xf32>,
      %c0_42 = arith.constant 0 : index
      %c1 = arith.constant 1 : index
      %74 = vector.load %arg5[%c0_42, %c1] : memref<4x4xf32, #tpu.memory_space<vmem>>, vector<4x1xf32>
      tpu.vector_store %arg5[%c0_42, %c1], %72 {strides = array<i32>} : memref<4x4xf32, #tpu.memory_space<vmem>>, vector<4x1xf32>,
      %cst_43 = arith.constant 0.949999988 : f32
      %75 = vector.broadcast %cst_43 : f32 to vector<4x1xf32>
      %76 = arith.mulf %75, %43 : vector<4x1xf32>
      %cst_44 = arith.constant 5.000000e-02 : f32
      %77 = vector.broadcast %cst_44 : f32 to vector<4x1xf32>
      %78 = arith.mulf %77, %55 : vector<4x1xf32>
      %79 = arith.addf %76, %78 : vector<4x1xf32>
      %c0_45 = arith.constant 0 : index
      %c2_46 = arith.constant 2 : index
      %80 = vector.load %arg5[%c0_45, %c2_46] : memref<4x4xf32, #tpu.memory_space<vmem>>, vector<4x1xf32>
      tpu.vector_store %arg5[%c0_45, %c2_46], %79 {strides = array<i32>} : memref<4x4xf32, #tpu.memory_space<vmem>>, vector<4x1xf32>,
      %cst_47 = arith.constant 0.949999988 : f32
      %81 = vector.broadcast %cst_47 : f32 to vector<4x1xf32>
      %82 = arith.mulf %81, %44 : vector<4x1xf32>
      %cst_48 = arith.constant 5.000000e-02 : f32
      %83 = vector.broadcast %cst_48 : f32 to vector<4x1xf32>
      %84 = arith.mulf %83, %54 : vector<4x1xf32>
      %85 = arith.addf %82, %84 : vector<4x1xf32>
      %c0_49 = arith.constant 0 : index
      %c3 = arith.constant 3 : index
      %86 = vector.load %arg5[%c0_49, %c3] : memref<4x4xf32, #tpu.memory_space<vmem>>, vector<4x1xf32>
      tpu.vector_store %arg5[%c0_49, %c3], %85 {strides = array<i32>} : memref<4x4xf32, #tpu.memory_space<vmem>>, vector<4x1xf32>,
    } else {
    }
    return
  }
  func.func @transform_0(%arg0: i32, %arg1: i32, %arg2: i32) -> (i32, i32) {
    %c0_i32 = arith.constant 0 : i32
    %c0_i32_0 = arith.constant 0 : i32
    return %arg0, %c0_i32 : i32, i32
  }
  func.func @transform_1(%arg0: i32, %arg1: i32, %arg2: i32) -> (i32, i32, i32) {
    %c0_i32 = arith.constant 0 : i32
    return %arg1, %arg0, %arg2 : i32, i32, i32
  }
  func.func @transform_2(%arg0: i32, %arg1: i32, %arg2: i32) -> (i32, i32) {
    %c0_i32 = arith.constant 0 : i32
    %c0_i32_0 = arith.constant 0 : i32
    return %arg0, %c0_i32 : i32, i32
  }
}

</mosaic_0001>

<llo_original>
// kernel: tpu_custom_call.1
$region0: #{tpu_custom_call.1}
  #allocation0 [shape = 'u32[]', space=smem, size = 0x4, offset = 0x4, fixed_abs, tag = 'smem constant byte address 0x4 - core index']
  #allocation1 [shape = 'u32[144,128]{1,0:T(1,128)}', space=vmem, size = 0x12000, scoped, tag = 'internal scratch']
  #allocation2 [shape = 'f32[4,128]{1,0:T(4,128)}', space=vmem, size = 0x800, scoped, tag = 'scratch operand']
  #allocation3 [shape = 'f32[4,128]{1,0:T(4,128)}', space=vmem, size = 0x800, scoped, tag = 'scratch operand']
  %s0 = inlined_call_operand.hbm [shape: f32[4,4], index: 0, kind: input, shape index: {}]
  %s1 = inlined_call_operand.hbm [shape: f32[2,4,256], index: 1, kind: input, shape index: {}]
  %s2 = inlined_call_operand.hbm [shape: f32[4,4], index: 2, kind: output, shape index: {}]
  %s3 = sld [smem:[#allocation0]]
  $region34: #{tpu_custom_call.1} parent=0
    _
  %s5 = ssub.s32 1, %s3
  %s6 = scalar_select 0, %s5, %s3
  $region1: #{tpu_custom_call.1} parent=0
    #allocation4 [shape = 'u8[2048]{0}', space=vmem, size = 0x800, scoped, tag = 'input window, operand 0, single buffered']
    #allocation5 [shape = 's32[1]{0}', space=sflag, size = 0x4, scoped, tag = 'scoped memory for tpu_custom_call.1']
    #allocation6 [shape = 's32[1]{0}', space=sflag, size = 0x4, scoped, tag = 'scoped memory for tpu_custom_call.1']
    #allocation7 [shape = 'u8[8192]{0}', space=vmem, size = 0x2000, scoped, tag = 'input window, operand 1, single buffered']
    #allocation8 [shape = 's32[1]{0}', space=sflag, size = 0x4, scoped, tag = 'scoped memory for tpu_custom_call.1']
    #allocation9 [shape = 'u8[2048]{0}', space=vmem, size = 0x800, scoped, tag = 'output window, operand 0, single buffered']
    %7 = vsyncpa [#allocation5], 0
    %8 = vsyncpa [#allocation8], 0
    %9 = vsyncpa [#allocation6], 0
    // Predicated region
    $region2: #{tpu_custom_call.1} parent=1 // pred_check
      _
    $region3: #{tpu_custom_call.1} parent=1 // pred_check_branch
      %11 = sbr.rel (0) target = $region5
    $region4: #{tpu_custom_call.1} parent=1 // pred_region
      %s13 = ssub.s32 64, 64
      %14 = vsyncadd [#allocation5], %s13
      %s16 = sshll.u32 [#allocation4], 4
      %s17 = int_to_ptr.vmem [resolvable:$true] %s16
      %19 = dma.hbm_to_vmem [thread:$0]  %s0, 64, %s17, [#allocation5]
    $region5: #{tpu_custom_call.1} parent=1 // pred_fallthru
      _
    // Predicated region
    $region6: #{tpu_custom_call.1} parent=1 // pred_check
      _
    $region7: #{tpu_custom_call.1} parent=1 // pred_check_branch
      %21 = sbr.rel (0) target = $region9
    $region8: #{tpu_custom_call.1} parent=1 // pred_region
      %s23 = ssub.s32 256, 256
      %24 = vsyncadd [#allocation8], %s23
      %s25 = sshll.u32 [#allocation7], 4
      %s26 = int_to_ptr.vmem [resolvable:$true] %s25
      %31 = dma.hbm_to_vmem [thread:$0]  %s1, 256, %s26, [#allocation8], 128, 128, 8
    $region9: #{tpu_custom_call.1} parent=1 // pred_fallthru
      _
    // Predicated region
    $region10: #{tpu_custom_call.1} parent=1 // pred_check
      _
    $region11: #{tpu_custom_call.1} parent=1 // pred_check_branch
      %33 = sbr.rel (0) target = $region13
    $region12: #{tpu_custom_call.1} parent=1 // pred_region
      %34 = dma.done [#allocation5], 64
    $region13: #{tpu_custom_call.1} parent=1 // pred_fallthru
      _
    // Predicated region
    $region14: #{tpu_custom_call.1} parent=1 // pred_check
      _
    $region15: #{tpu_custom_call.1} parent=1 // pred_check_branch
      %36 = sbr.rel (0) target = $region17
    $region16: #{tpu_custom_call.1} parent=1 // pred_region
      %37 = dma.done [#allocation8], 256
    $region17: #{tpu_custom_call.1} parent=1 // pred_fallthru
      _
    %p38 = scmp.eq.s32.totalorder 0, 0
    %p39 = scmp.eq.s32.totalorder 0, 0
    %p40 = pnand %p38, %p39
    %p41 = pneg %p40
    // Predicated region
    $region18: #{tpu_custom_call.1} parent=1 // pred_check
      _
    $region19: #{tpu_custom_call.1} parent=1 // pred_check_branch
      %43 = sbr.rel (%p40) target = $region21
    $region20: #{tpu_custom_call.1} parent=1 // pred_region
      %44 = vst [vmem:[#allocation2] sm:$0xf] 0.0
      %45 = vst [vmem:[#allocation3] sm:$0xf] 0.0
    $region21: #{tpu_custom_call.1} parent=1 // pred_fallthru
      _
    %v46 = vld [vmem:[#allocation4] sm:$0xf]
    %v47 = vld [vmem:[#allocation7] sm:$0xff]
    %v48 = vld [vmem:[#allocation7 + $0x8] sm:$0xff]
    %50 = vset.pattern.permute.xlu0 2
    %51 = vperm.xlu0 %50, %v46
    %v52 = vpop.permute.xlu0 %51
    %v54 = vunpack.c.l.s4 839922192
    %v55 = vunpack.c.0.s8 %v54
    %v56 = vlaneseq
    %v57 = vshrl.u32 %v56, 7
    %v58 = vsub.s32 %v55, %v57
    %v59 = vrot.slane %v52, %v58
    %v61 = vsub.f32 %v47, %v59
    %v62 = vsub.f32 %v48, %v59
    %v65 = vcombine.high %v61, %v61
    %v66 = vcombine.high %v62, %v62
    %vm69 = vcmask 1043456
    %v70 = vsel %vm69, %v61, 0.0
    %v71 = vsel %vm69, %v62, 0.0
    %v72 = vadd.f32 %v70, %v71
    %v73 = vsel %vm69, %v65, 0.0
    %v74 = vsel %vm69, %v66, 0.0
    %v75 = vadd.f32 %v73, %v74
    %v76 = vmul.f32 %v61, %v61
    %v77 = vmul.f32 %v62, %v62
    %v80 = vcombine.high %v76, %v76
    %v81 = vcombine.high %v77, %v77
    %v84 = vsel %vm69, %v76, 0.0
    %v85 = vsel %vm69, %v77, 0.0
    %v86 = vadd.f32 %v84, %v85
    %v87 = vsel %vm69, %v80, 0.0
    %v88 = vsel %vm69, %v81, 0.0
    %v89 = vadd.f32 %v87, %v88
    %v90 = vld [vmem:[#allocation2] sm:$0xf]
    %v91 = vadd.f32 %v90, %v72
    %92 = vst [vmem:[#allocation2] sm:$0xf] %v91
    %v93 = vld [vmem:[#allocation3] sm:$0xf]
    %v94 = vadd.f32 %v93, %v86
    %95 = vst [vmem:[#allocation3] sm:$0xf] %v94
    %v96 = vld [vmem:[#allocation2] sm:$0xf]
    %v97 = vadd.f32 %v96, %v75
    %98 = vst [vmem:[#allocation2] sm:$0xf] %v97
    %v99 = vld [vmem:[#allocation3] sm:$0xf]
    %v100 = vadd.f32 %v99, %v89
    %101 = vst [vmem:[#allocation3] sm:$0xf] %v100
    // Predicated region
    $region22: #{tpu_custom_call.1} parent=1 // pred_check
      _
    $region23: #{tpu_custom_call.1} parent=1 // pred_check_branch
      %103 = sbr.rel (%p40) target = $region25
    $region24: #{tpu_custom_call.1} parent=1 // pred_region
      %v104 = vld [vmem:[#allocation2] sm:$0xf]
      %v105 = vsel %vm69, %v104, 0.0
      %106 = vadd.xlane.f32.xlu0 %v105
      %v107 = vpop.xlane.xlu0 %106
      %v108 = vld [vmem:[#allocation3] sm:$0xf]
      %v109 = vsel %vm69, %v108, 0.0
      %110 = vadd.xlane.f32.xlu0 %v109
      %v111 = vpop.xlane.xlu0 %110
      %v112 = vld [vmem:[#allocation4] sm:$0xf]
      %v113 = vmul.f32 %v107, 0.001953125
      %v114 = vmul.f32 %v111, 0.001953125
      %v115 = vmul.f32 %v113, %v113
      %v116 = vsub.f32 %v114, %v115
      %v117 = vmax.f32 %v116, 0.0
      %v118 = vmul.f32 %v117, 1.0019569
      %v119 = vadd.f32 %v113, %v112
      %v120 = vadd.f32 %v112, 1e-05
      %v121 = vrsqrt.pop %v120
      %v122 = vadd.f32 %v118, 1e-05
      %v123 = vrsqrt.pop %v122
      %v124 = vmul.f32 %v122, %v123
      %vm125 = vcmp.eq.f32.partialorder %v122, inf
      %v126 = vsel %vm125, %v122, %v124
      %vm127 = vcmp.eq.f32.partialorder %v122, 0.0
      %v128 = vand.u32 %v122, 2147483648
      %v129 = vsel %vm127, %v128, %v126
      %v130 = vmul.f32 %v129, %v121
      %v131 = vmul.f32 %v113, %v121
      %133 = vrot.lane.b32.xlu0 %v130, 125
      %v134 = vpop.permute.xlu0 %133
      %v136 = vmul.f32 %v112, %v134
      %138 = vrot.lane.b32.xlu0 %v131, 125
      %v139 = vpop.permute.xlu0 %138
      %v141 = vmul.f32 %v112, %v139
      %143 = vrot.lane.b32.xlu0 %v141, 1
      %v144 = vpop.permute.xlu0 %143
      %v146 = vadd.f32 %v112, %v144
      %v147 = vadd.f32 %v117, 1e-05
      %v148 = vrsqrt.pop %v147
      %v149 = vmul.f32 %v136, %v148
      %151 = vrot.lane.b32.xlu0 %v149, 2
      %v152 = vpop.permute.xlu0 %151
      %v154 = vmul.f32 %v119, %v152
      %156 = vrot.lane.b32.xlu0 %v154, 127
      %v157 = vpop.permute.xlu0 %156
      %v159 = vsub.f32 %v146, %v157
      %vm160 = vcmask 3072
      %161 = vst.msk [vmem:[#allocation9] sm:$0xf] %vm160, %v149
      %vm162 = vcmask 11272
      %163 = vst.msk [vmem:[#allocation9] sm:$0xf] %vm162, %v159
      %v164 = vmul.f32 %v112, 0.95
      %v165 = vmul.f32 %v119, 0.05
      %v166 = vadd.f32 %v164, %v165
      %vm167 = vcmask 19472
      %168 = vst.msk [vmem:[#allocation9] sm:$0xf] %vm167, %v166
      %v169 = vmul.f32 %v118, 0.05
      %v170 = vadd.f32 %v164, %v169
      %vm171 = vcmask 27672
      %172 = vst.msk [vmem:[#allocation9] sm:$0xf] %vm171, %v170
    $region25: #{tpu_custom_call.1} parent=1 // pred_fallthru
      _
    // Predicated region
    $region26: #{tpu_custom_call.1} parent=1 // pred_check
      _
    $region27: #{tpu_custom_call.1} parent=1 // pred_check_branch
      %174 = sbr.rel (0) target = $region29
    $region28: #{tpu_custom_call.1} parent=1 // pred_region
      %s176 = ssub.s32 64, 64
      %177 = vsyncadd [#allocation6], %s176
      %s179 = sshll.u32 [#allocation9], 4
      %s180 = int_to_ptr.vmem [resolvable:$true] %s179
      %182 = dma.vmem_to_hbm [thread:$0]  %s180, 64, %s2, [#allocation6]
    $region29: #{tpu_custom_call.1} parent=1 // pred_fallthru
      _
    // Predicated region
    $region30: #{tpu_custom_call.1} parent=1 // pred_check
      _
    $region31: #{tpu_custom_call.1} parent=1 // pred_check_branch
      %184 = sbr.rel (0) target = $region33
    $region32: #{tpu_custom_call.1} parent=1 // pred_region
      %185 = dma.done [#allocation6], 64
    $region33: #{tpu_custom_call.1} parent=1 // pred_fallthru
      _
    %186 = vsyncpa [#allocation5], 1
    %187 = vsyncpa [#allocation8], 1
    %188 = vsyncpa [#allocation6], 1

</llo_original>
